<compile_context>
chip_gen: v6e
topology: v6e:2x2x1
jax: 0.10.0
libtpu: 0.0.40
codegen_flags: <defaults>
</compile_context>

<pallas_src>
import jax
import jax.numpy as jnp
from jax import lax
from jax.experimental import pallas as pl
from jax.experimental.pallas import tpu as pltpu


LEAKY_SLOPE = 0.02


# ---------------------------------------------------------------------------
# Pallas kernel: fused  lrelu(W1 @ x + b1) -> lrelu(W2 @ . + b2) -> w3 . + b3
# on a channel-major (C, tile) pixel tile, processed in `chunk`-lane pieces.
# ---------------------------------------------------------------------------
def _make_disc_xz_kernel(chunk):
    def kernel(x_ref, w1_ref, b1_ref, w2_ref, b2_ref, w3_ref, b3_ref, o_ref):
        neg = jnp.float32(LEAKY_SLOPE)

        # Tiny params: load once per tile, reuse across sub-chunks (no per-chunk
        # broadcasts inside the loop).
        w1 = w1_ref[...]          # (C1, C1) bf16
        w2 = w2_ref[...]          # (C2, C1) bf16
        b1 = b1_ref[...]          # (C1, 1)  f32
        b2 = b2_ref[...]          # (C2, 1)  f32
        w3 = w3_ref[...]          # (C2, 1)  f32
        b3 = b3_ref[0]            # scalar   f32 (SMEM)

        n_chunks = x_ref.shape[-1] // chunk

        def body(c, carry):
            off = pl.multiple_of(c * chunk, chunk)
            # In-kernel bf16 cast of the f32 input chunk (no host-side pass).
            x = x_ref[:, pl.ds(off, chunk)].astype(jnp.bfloat16)

            # layer 1: (C1, C1) @ (C1, chunk) on MXU, f32 accumulation
            h = jnp.dot(w1, x, preferred_element_type=jnp.float32)
            h = h + b1
            h = jnp.maximum(h, neg * h).astype(jnp.bfloat16)   # LeakyReLU(0.02)
            # TODO(synk): Dropout2d(0.2) is identity in eval mode; not applied.

            # layer 2: (C2, C1) @ (C1, chunk) on MXU, f32 accumulation
            h = jnp.dot(w2, h, preferred_element_type=jnp.float32)
            h = h + b2
            h = jnp.maximum(h, neg * h)                        # LeakyReLU(0.02)

            # layer 3: single output channel -> keep OFF the MXU.
            # VPU multiply by the (C2, 1) weight column + sublane (XLU) reduce.
            o = jnp.sum(h * w3, axis=0, keepdims=True) + b3    # (1, chunk)
            o_ref[:, pl.ds(off, chunk)] = o.astype(o_ref.dtype)
            return carry

        lax.fori_loop(0, n_chunks, body, 0, unroll=True)

    return kernel


def _round_up(x, m):
    return ((x + m - 1) // m) * m


def _pick_tile(n_lanes, cap):
    """Largest multiple of 128 that divides n_lanes and is <= cap, else None."""
    best = None
    t = 128
    while t <= min(cap, n_lanes):
        if n_lanes % t == 0:
            best = t
        t += 128
    return best


def disc_xz_forward(x_nchw, params, *, max_tile_hw=4096):
    """x_nchw: (N, 2*zd, H, W) float32. Returns (N, 1, H, W) float32."""
    (w1, b1), (w2, b2), (w3, b3) = params   # wk: (C_out_k, C_in_k), bk: (C_out_k, 1)
    N, C1, H, W = x_nchw.shape
    HW = H * W
    C2 = w2.shape[0]

    # Parameter prep (tiny): bf16 MXU operands, f32 biases / layer-3 column.
    w1b = w1.astype(jnp.bfloat16)                        # (C1, C1)
    w2b = w2.astype(jnp.bfloat16)                        # (C2, C1)
    b1c = b1.reshape(C1, 1).astype(jnp.float32)
    b2c = b2.reshape(C2, 1).astype(jnp.float32)
    w3c = w3.reshape(1, C2).T.astype(jnp.float32)        # (C2, 1) VPU path
    b3s = b3.reshape(1).astype(jnp.float32)              # SMEM scalar

    param_bytes = w1b.size * 2 + w2b.size * 2 + (C1 + C2 + C2 + 1) * 4

    tile = _pick_tile(HW, max_tile_hw)

    if tile is not None:
        # ---- per-image lane layout: NCHW -> (N, C1, H*W) is a free reshape. ----
        chunk = 256 if tile % 256 == 0 else 128
        x3d = x_nchw.reshape(N, C1, HW)
        cost = pl.CostEstimate(
            flops=int(2 * (C1 * C1 + C2 * C1 + C2) * N * HW),
            transcendentals=0,
            bytes_accessed=int(N * C1 * HW * 4 + N * HW * 4 + param_bytes))
        out = pl.pallas_call(
            _make_disc_xz_kernel(chunk),
            out_shape=jax.ShapeDtypeStruct((N, 1, HW), jnp.float32),
            grid_spec=pltpu.PrefetchScalarGridSpec(
                num_scalar_prefetch=0,
                grid=(N, HW // tile),
                in_specs=[
                    pl.BlockSpec((None, C1, tile), lambda n, j: (n, 0, j)),  # x
                    pl.BlockSpec((C1, C1), lambda n, j: (0, 0)),             # W1
                    pl.BlockSpec((C1, 1), lambda n, j: (0, 0)),              # b1
                    pl.BlockSpec((C2, C1), lambda n, j: (0, 0)),             # W2
                    pl.BlockSpec((C2, 1), lambda n, j: (0, 0)),              # b2
                    pl.BlockSpec((C2, 1), lambda n, j: (0, 0)),              # w3 col
                    pl.BlockSpec(memory_space=pltpu.MemorySpace.SMEM),       # b3
                ],
                out_specs=pl.BlockSpec((None, 1, tile), lambda n, j: (n, 0, j)),
            ),
            compiler_params=pltpu.CompilerParams(
                dimension_semantics=("parallel", "parallel")),
            cost_estimate=cost,
        )(x3d, w1b, b1c, w2b, b2c, w3c, b3s)
        return out.reshape(N, 1, H, W)

    # ---- small / ragged H*W: fold batch into the lane axis (one transpose). ----
    P = N * HW
    x2d = x_nchw.reshape(N, C1, HW).transpose(1, 0, 2).reshape(C1, P)
    tile = min(max_tile_hw, _round_up(P, 128))
    P_pad = _round_up(P, tile)
    if P_pad != P:
        x2d = jnp.pad(x2d, ((0, 0), (0, P_pad - P)))
    chunk = 256 if tile % 256 == 0 else 128
    cost = pl.CostEstimate(
        flops=int(2 * (C1 * C1 + C2 * C1 + C2) * P_pad),
        transcendentals=0,
        bytes_accessed=int(C1 * P_pad * 4 + P_pad * 4 + param_bytes))
    out = pl.pallas_call(
        _make_disc_xz_kernel(chunk),
        out_shape=jax.ShapeDtypeStruct((1, P_pad), jnp.float32),
        grid_spec=pltpu.PrefetchScalarGridSpec(
            num_scalar_prefetch=0,
            grid=(P_pad // tile,),
            in_specs=[
                pl.BlockSpec((C1, tile), lambda j: (0, j)),                  # x
                pl.BlockSpec((C1, C1), lambda j: (0, 0)),                    # W1
                pl.BlockSpec((C1, 1), lambda j: (0, 0)),                     # b1
                pl.BlockSpec((C2, C1), lambda j: (0, 0)),                    # W2
                pl.BlockSpec((C2, 1), lambda j: (0, 0)),                     # b2
                pl.BlockSpec((C2, 1), lambda j: (0, 0)),                     # w3 col
                pl.BlockSpec(memory_space=pltpu.MemorySpace.SMEM),           # b3
            ],
            out_specs=pl.BlockSpec((1, tile), lambda j: (0, j)),
        ),
        compiler_params=pltpu.CompilerParams(
            dimension_semantics=("parallel",)),
        cost_estimate=cost,
    )(x2d, w1b, b1c, w2b, b2c, w3c, b3s)
    out = out[:, :P].reshape(1, N, HW).transpose(1, 0, 2)
    return out.reshape(N, 1, H, W)


# ---------------------------------------------------------------------------
# Spectral norm (one power iteration) — parameter-setup glue in plain JAX
# ---------------------------------------------------------------------------
def l2normalize(v, eps=1e-12):
    return v / (jnp.linalg.norm(v) + eps)


def spectral_normalize(w_bar, u, v):
    """w_bar: (C_out, C_in, 1, 1) conv weight. Returns normalized weight."""
    # TODO(synk): PyTorch persists the updated u/v buffers across steps; here a
    # single power iteration is applied at parameter-prep time only.
    c_out = w_bar.shape[0]
    w2 = w_bar.reshape(c_out, -1)
    v_new = l2normalize(w2.T @ u)
    u_new = l2normalize(w2 @ v_new)
    sigma = u_new @ (w2 @ v_new)
    return w_bar / sigma


def init_params(key, zd=32):
    """Deterministic synthetic parameters for the three SpectralNorm(Conv2d 1x1)."""
    c_in = [2 * zd, 2 * zd, zd]
    c_out = [2 * zd, zd, 1]
    params = []
    for i in range(3):
        key, kw, kb, ku, kv = jax.random.split(key, 5)
        w_bar = jax.random.normal(kw, (c_out[i], c_in[i], 1, 1), jnp.float32) * 0.1
        b = jax.random.normal(kb, (c_out[i],), jnp.float32) * 0.05
        u = l2normalize(jax.random.normal(ku, (c_out[i],), jnp.float32))
        v = l2normalize(jax.random.normal(kv, (c_in[i],), jnp.float32))
        w_sn = spectral_normalize(w_bar, u, v)                  # (C_out, C_in, 1, 1)
        w_mat = w_sn.reshape(c_out[i], c_in[i])                 # channel-major
        params.append((w_mat, b.reshape(c_out[i], 1)))
    return params


# ---------------------------------------------------------------------------
# Reference (plain JAX) with matching bf16 operand quantization
# ---------------------------------------------------------------------------
def reference_forward(x_nchw, params):
    (w1, b1), (w2, b2), (w3, b3) = params
    N, C1, H, W = x_nchw.shape
    f32 = jnp.float32
    x = x_nchw.reshape(N, C1, H * W)

    xb = x.astype(jnp.bfloat16).astype(f32)
    w1b = w1.astype(jnp.bfloat16).astype(f32)
    w2b = w2.astype(jnp.bfloat16).astype(f32)

    h = jnp.einsum('oc,ncp->nop', w1b, xb, precision='highest') + b1[None]
    h = jnp.maximum(h, 0.02 * h)
    h = h.astype(jnp.bfloat16).astype(f32)
    h = jnp.einsum('oc,ncp->nop', w2b, h, precision='highest') + b2[None]
    h = jnp.maximum(h, 0.02 * h)
    o = jnp.einsum('oc,ncp->nop', w3, h, precision='highest') + b3[None]
    return o.reshape(N, 1, H, W)


if __name__ == "__main__":
    zd = 32                      # small version of zd=128
    key = jax.random.PRNGKey(0)
    kx, kp, kx2 = jax.random.split(key, 3)
    params = init_params(kp, zd=zd)

    # Test 1: spatial input (per-image lane path; tile chosen automatically).
    N, H, W = 2, 16, 16          # H*W = 256 pixels per image
    x = jax.random.normal(kx, (N, 2 * zd, H, W), jnp.float32)
    out = jax.block_until_ready(disc_xz_forward(x, params))
    ref = reference_forward(x, params)
    assert out.shape == (N, 1, H, W), out.shape
    assert jnp.allclose(out, ref, atol=1e-2, rtol=1e-2), "mismatch (spatial path)"

    # Test 2: the common 1x1 joint-discriminator case (batch folded into lanes,
    # lane axis zero-padded to 128).
    x2 = jax.random.normal(kx2, (N, 2 * zd, 1, 1), jnp.float32)
    out2 = jax.block_until_ready(disc_xz_forward(x2, params))
    ref2 = reference_forward(x2, params)
    assert out2.shape == (N, 1, 1, 1), out2.shape
    assert jnp.allclose(out2, ref2, atol=1e-2, rtol=1e-2), "mismatch (1x1 path)"

    print("KERNEL_OK")
</pallas_src>

<mosaic_0001>
module attributes {stable_mosaic.version = 11 : i64} {
  func.func @kernel(%arg0: i32, %arg1: i32, %arg2: memref<1x64x256xf32, #tpu.memory_space<vmem>>, %arg3: memref<64x64xbf16, #tpu.memory_space<vmem>>, %arg4: memref<64x1xf32, #tpu.memory_space<vmem>>, %arg5: memref<32x64xbf16, #tpu.memory_space<vmem>>, %arg6: memref<32x1xf32, #tpu.memory_space<vmem>>, %arg7: memref<32x1xf32, #tpu.memory_space<vmem>>, %arg8: memref<1xf32, #tpu.memory_space<smem>>, %arg9: memref<1x1x256xf32, #tpu.memory_space<vmem>>) attributes {dimension_semantics = [#tpu.dimension_semantics<parallel>, #tpu.dimension_semantics<parallel>], iteration_bounds = array<i64: 2, 1>, scalar_prefetch = 0 : i64, scratch_operands = 0 : i64, tpu.core_type = #tpu.core_type<tc>, window_params = [{transform_indices = @transform_0, window_bounds = array<i64: 1, 64, 256>}, {pipeline_mode = #tpu.pipeline_mode<synchronous>, transform_indices = @transform_1, window_bounds = array<i64: 64, 64>}, {pipeline_mode = #tpu.pipeline_mode<synchronous>, transform_indices = @transform_2, window_bounds = array<i64: 64, 1>}, {pipeline_mode = #tpu.pipeline_mode<synchronous>, transform_indices = @transform_3, window_bounds = array<i64: 32, 64>}, {pipeline_mode = #tpu.pipeline_mode<synchronous>, transform_indices = @transform_4, window_bounds = array<i64: 32, 1>}, {pipeline_mode = #tpu.pipeline_mode<synchronous>, transform_indices = @transform_5, window_bounds = array<i64: 32, 1>}, {transform_indices = @transform_6, window_bounds = array<i64: 1>}, {transform_indices = @transform_7, window_bounds = array<i64: 1, 1, 256>}]} {
    %c0 = arith.constant 0 : index
    %c0_0 = arith.constant 0 : index
    %0 = vector.load %arg3[%c0, %c0_0] : memref<64x64xbf16, #tpu.memory_space<vmem>>, vector<64x64xbf16>
    %c0_1 = arith.constant 0 : index
    %c0_2 = arith.constant 0 : index
    %1 = vector.load %arg5[%c0_1, %c0_2] : memref<32x64xbf16, #tpu.memory_space<vmem>>, vector<32x64xbf16>
    %c0_3 = arith.constant 0 : index
    %c0_4 = arith.constant 0 : index
    %2 = vector.load %arg4[%c0_3, %c0_4] : memref<64x1xf32, #tpu.memory_space<vmem>>, vector<64x1xf32>
    %c0_5 = arith.constant 0 : index
    %c0_6 = arith.constant 0 : index
    %3 = vector.load %arg6[%c0_5, %c0_6] : memref<32x1xf32, #tpu.memory_space<vmem>>, vector<32x1xf32>
    %c0_7 = arith.constant 0 : index
    %c0_8 = arith.constant 0 : index
    %4 = vector.load %arg7[%c0_7, %c0_8] : memref<32x1xf32, #tpu.memory_space<vmem>>, vector<32x1xf32>
    %c0_9 = arith.constant 0 : index
    %5 = memref.load %arg8[%c0_9] : memref<1xf32, #tpu.memory_space<smem>>
    %cst = arith.constant 2.000000e-02 : f32
    %c0_i32 = arith.constant 0 : i32
    %c256_i32 = arith.constant 256 : i32
    %6 = arith.muli %c0_i32, %c256_i32 : i32
    %7 = tpu.assume_multiple %6, 256 : i32
    %c0_10 = arith.constant 0 : index
    %c0_11 = arith.constant 0 : index
    %8 = arith.index_cast %7 : i32 to index
    %9 = vector.load %arg2[%c0_10, %c0_11, %8] : memref<1x64x256xf32, #tpu.memory_space<vmem>>, vector<1x64x256xf32>
    %10 = vector.shape_cast %9 : vector<1x64x256xf32> to vector<64x256xf32>
    %11 = arith.truncf %10 : vector<64x256xf32> to vector<64x256xbf16>
    %cst_12 = arith.constant dense<0.000000e+00> : vector<64x256xf32>
    %12 = tpu.matmul %0, %11, %cst_12 {dimension_numbers = #tpu.dot_dimension_numbers<[1], [0], [0], [1], [0, 0, 1, 1], [], []>} : vector<64x64xbf16>, vector<64x256xbf16>, vector<64x256xf32> -> vector<64x256xf32>
    %13 = vector.broadcast %2 : vector<64x1xf32> to vector<64x256xf32>
    %14 = arith.addf %12, %13 : vector<64x256xf32>
    %15 = vector.broadcast %cst : f32 to vector<64x256xf32>
    %16 = arith.mulf %15, %14 : vector<64x256xf32>
    %17 = arith.maximumf %14, %16 : vector<64x256xf32>
    %18 = arith.truncf %17 : vector<64x256xf32> to vector<64x256xbf16>
    %cst_13 = arith.constant dense<0.000000e+00> : vector<32x256xf32>
    %19 = tpu.matmul %1, %18, %cst_13 {dimension_numbers = #tpu.dot_dimension_numbers<[1], [0], [0], [1], [0, 0, 1, 1], [], []>} : vector<32x64xbf16>, vector<64x256xbf16>, vector<32x256xf32> -> vector<32x256xf32>
    %20 = vector.broadcast %3 : vector<32x1xf32> to vector<32x256xf32>
    %21 = arith.addf %19, %20 : vector<32x256xf32>
    %22 = vector.broadcast %cst : f32 to vector<32x256xf32>
    %23 = arith.mulf %22, %21 : vector<32x256xf32>
    %24 = arith.maximumf %21, %23 : vector<32x256xf32>
    %25 = vector.broadcast %4 : vector<32x1xf32> to vector<32x256xf32>
    %26 = arith.mulf %24, %25 : vector<32x256xf32>
    %cst_14 = arith.constant dense<0.000000e+00> : vector<256xf32>
    %27 = vector.multi_reduction <add>, %26, %cst_14 [0] : vector<32x256xf32> to vector<256xf32>
    %28 = vector.shape_cast %27 : vector<256xf32> to vector<1x256xf32>
    %29 = vector.broadcast %5 : f32 to vector<1x256xf32>
    %30 = arith.addf %28, %29 : vector<1x256xf32>
    %c0_15 = arith.constant 0 : index
    %c0_16 = arith.constant 0 : index
    %31 = arith.index_cast %7 : i32 to index
    %32 = vector.load %arg9[%c0_15, %c0_16, %31] : memref<1x1x256xf32, #tpu.memory_space<vmem>>, vector<1x1x256xf32>
    %33 = vector.shape_cast %32 : vector<1x1x256xf32> to vector<1x256xf32>
    %34 = vector.shape_cast %30 : vector<1x256xf32> to vector<1x1x256xf32>
    tpu.vector_store %arg9[%c0_15, %c0_16, %31], %34 {strides = array<i32>} : memref<1x1x256xf32, #tpu.memory_space<vmem>>, vector<1x1x256xf32>,
    %c1_i32 = arith.constant 1 : i32
    return
  }
  func.func @transform_0(%arg0: i32, %arg1: i32) -> (i32, i32, i32) {
    %c0_i32 = arith.constant 0 : i32
    %c0_i32_0 = arith.constant 0 : i32
    return %arg0, %c0_i32, %arg1 : i32, i32, i32
  }
  func.func @transform_1(%arg0: i32, %arg1: i32) -> (i32, i32) {
    %c0_i32 = arith.constant 0 : i32
    %c0_i32_0 = arith.constant 0 : i32
    %c0_i32_1 = arith.constant 0 : i32
    return %c0_i32, %c0_i32_0 : i32, i32
  }
  func.func @transform_2(%arg0: i32, %arg1: i32) -> (i32, i32) {
    %c0_i32 = arith.constant 0 : i32
    %c0_i32_0 = arith.constant 0 : i32
    %c0_i32_1 = arith.constant 0 : i32
    return %c0_i32, %c0_i32_0 : i32, i32
  }
  func.func @transform_3(%arg0: i32, %arg1: i32) -> (i32, i32) {
    %c0_i32 = arith.constant 0 : i32
    %c0_i32_0 = arith.constant 0 : i32
    %c0_i32_1 = arith.constant 0 : i32
    return %c0_i32, %c0_i32_0 : i32, i32
  }
  func.func @transform_4(%arg0: i32, %arg1: i32) -> (i32, i32) {
    %c0_i32 = arith.constant 0 : i32
    %c0_i32_0 = arith.constant 0 : i32
    %c0_i32_1 = arith.constant 0 : i32
    return %c0_i32, %c0_i32_0 : i32, i32
  }
  func.func @transform_5(%arg0: i32, %arg1: i32) -> (i32, i32) {
    %c0_i32 = arith.constant 0 : i32
    %c0_i32_0 = arith.constant 0 : i32
    %c0_i32_1 = arith.constant 0 : i32
    return %c0_i32, %c0_i32_0 : i32, i32
  }
  func.func @transform_6(%arg0: i32, %arg1: i32) -> i32 {
    %c0_i32 = arith.constant 0 : i32
    %c0_i32_0 = arith.constant 0 : i32
    return %c0_i32 : i32
  }
  func.func @transform_7(%arg0: i32, %arg1: i32) -> (i32, i32, i32) {
    %c0_i32 = arith.constant 0 : i32
    %c0_i32_0 = arith.constant 0 : i32
    return %arg0, %c0_i32, %arg1 : i32, i32, i32
  }
}

</mosaic_0001>

<llo_original>
// kernel: tpu_custom_call.1
$region0: #{tpu_custom_call.1}
  #allocation0 [shape = 'u32[]', space=smem, size = 0x4, offset = 0x4, fixed_abs, tag = 'smem constant byte address 0x4 - core index']
  #allocation1 [shape = 'u32[144,128]{1,0:T(1,128)}', space=vmem, size = 0x12000, scoped, tag = 'internal scratch']
  #allocation2 [shape = 'f32[1]{0:T(128)S(6)}', space=smem, size = 0x200, scoped, tag = 'scoped memory for tpu_custom_call.1']
  %s0 = inlined_call_operand.hbm [shape: f32[2,64,256], index: 0, kind: input, shape index: {}]
  %s1 = inlined_call_operand.vmem [shape: bf16[64,64], index: 1, kind: input, shape index: {}]
  %s2 = inlined_call_operand.vmem [shape: f32[64,1], index: 2, kind: input, shape index: {}]
  %s3 = inlined_call_operand.vmem [shape: bf16[32,64], index: 3, kind: input, shape index: {}]
  %s4 = inlined_call_operand.vmem [shape: f32[32,1], index: 4, kind: input, shape index: {}]
  %s5 = inlined_call_operand.vmem [shape: f32[32,1], index: 5, kind: input, shape index: {}]
  %s6 = inlined_call_operand.<no memory space> [shape: f32[1], index: 6, kind: input, shape index: {}]
  %s7 = inlined_call_operand.hbm [shape: f32[2,1,256], index: 7, kind: output, shape index: {}]
  %s8 = sld [smem:[#allocation0]]
  $region65: #{tpu_custom_call.1} parent=0
    _
  %s10 = ssub.s32 1, %s8
  %s11 = scalar_select 0, %s10, %s8
  %12 = sst [smem:[#allocation2]] %s6
  $region1: #{tpu_custom_call.1} parent=0
    #allocation3 [shape = 'u8[131072]{0}', space=vmem, size = 0x20000, scoped, tag = 'input window, operand 0']
    #allocation4 [shape = 's32[2]{0}', space=sflag, size = 0x8, scoped, tag = 'scoped memory for tpu_custom_call.1']
    #allocation5 [shape = 's32[2]{0}', space=sflag, size = 0x8, scoped, tag = 'scoped memory for tpu_custom_call.1']
    #allocation6 [shape = 'u8[2048]{0}', space=vmem, size = 0x800, scoped, tag = 'output window, operand 0']
    %13 = vsyncpa [#allocation4], 0
    %s14 = scalar_lea.sflag [#allocation4], 1
    %15 = vsyncpa %s14, 0
    %16 = vsyncpa [#allocation5], 0
    %s17 = scalar_lea.sflag [#allocation5], 1
    %18 = vsyncpa %s17, 0
    loop: start=0, step=1, limit=4
    $region2: #{tpu_custom_call.1} parent=1 // loop_pre_header
      _
    $region3: #{tpu_custom_call.1} parent=1 // loop_header
      %s20 = sphi 0, %s24
      %p21 = scmp.ge.s32.totalorder %s20, 4
      %s27 = sphi 0, %s39
      %s28 = sphi 0, %s35
      %s29 = sphi 0, %s27
      %s30 = sphi 0, %s28
      %s31 = sphi 0, %s29
      %s32 = sphi 0, %s30
      %s44 = sphi 0, %s46
      %s47 = sphi 0, %s44
      %s48 = sphi 0, %s47
      %s64 = sphi 0, %s48
      %s68 = sphi 0, %s68
      %s70 = sphi 0, %s68
      %s71 = sphi 0, %s70
      %s85 = sphi 0, %s71
      %s89 = sphi 0, %s89
      %s91 = sphi 0, %s89
      %s92 = sphi 0, %s91
      %s106 = sphi 0, %s92
      %s110 = sphi 0, %s110
      %s112 = sphi 0, %s110
      %s113 = sphi 0, %s112
      %s127 = sphi 0, %s113
      %s131 = sphi 0, %s131
      %s133 = sphi 0, %s131
      %s134 = sphi 0, %s133
      %s148 = sphi 0, %s134
      %s152 = sphi 0, %s152
      %s154 = sphi 0, %s152
      %s155 = sphi 0, %s154
      %s169 = sphi 0, %s155
      %s173 = sphi 0, %s173
      %s175 = sphi 0, %s173
      %s176 = sphi 0, %s175
      %s190 = sphi 0, %s176
      %s198 = sphi 0, %s200
      %s201 = sphi 0, %s198
      %s202 = sphi 0, %s201
      %s218 = sphi 0, %s202
    $region4: #{tpu_custom_call.1} parent=1 // loop_header_branch
      %23 = sbr.rel (%p21) target = $region8
    $region5: #{tpu_custom_call.1} parent=1 // loop_body
      %s25 = ssub.s32 %s20, 1
      %s26 = ssub.s32 %s20, 2
      %s33 = sadd.s32 1, %s28
      %p34 = scmp.ge.s32.totalorder %s33, 1
      %s35 = scalar_select %p34, 0, %s33
      %s36 = sadd.s32 1, %s27
      %s37 = scalar_select %p34, %s36, %s27
      %p38 = scmp.ge.s32.totalorder %s37, 2
      %s39 = scalar_select %p38, 0, %s37
      %s40 = ssub.s32 %s27, %s39
      %s41 = ssub.s32 %s28, %s35
      %s42 = sor.u32 %s40, %s41
      %p43 = scmp.eq.s32.totalorder %s42, 0
      %s45 = sadd.s32 %s44, 1
      %s46 = scalar_select %p43, %s44, %s45
      %p49 = pneg %p43
      %p50 = scmp.eq.s32.totalorder %s20, 1
      %p51 = por %p49, %p50
      %p52 = scmp.ne.s32.totalorder %s44, %s47
      %p53 = scmp.eq.s32.totalorder %s20, 0
      %p54 = por %p52, %p53
      %p55 = scmp.ne.s32.totalorder %s44, %s47
      %p56 = scmp.eq.s32.totalorder %s25, 1
      %p57 = por %p55, %p56
      %p58 = scmp.ne.s32.totalorder %s47, %s48
      %p59 = scmp.eq.s32.totalorder %s25, 0
      %p60 = por %p58, %p59
      %p61 = scmp.ne.s32.totalorder %s47, %s48
      %p62 = scmp.eq.s32.totalorder %s26, 1
      %p63 = por %p61, %p62
      %p65 = scmp.ne.s32.totalorder %s48, %s64
      %p66 = scmp.eq.s32.totalorder %s26, 0
      %p67 = por %p65, %p66
      %s69 = sadd.s32 %s68, 1
      %p72 = scmp.eq.s32.totalorder %s20, 1
      %p73 = scmp.ne.s32.totalorder %s68, %s70
      %p74 = scmp.eq.s32.totalorder %s20, 0
      %p75 = por %p73, %p74
      %p76 = scmp.ne.s32.totalorder %s68, %s70
      %p77 = scmp.eq.s32.totalorder %s25, 1
      %p78 = por %p76, %p77
      %p79 = scmp.ne.s32.totalorder %s70, %s71
      %p80 = scmp.eq.s32.totalorder %s25, 0
      %p81 = por %p79, %p80
      %p82 = scmp.ne.s32.totalorder %s70, %s71
      %p83 = scmp.eq.s32.totalorder %s26, 1
      %p84 = por %p82, %p83
      %p86 = scmp.ne.s32.totalorder %s71, %s85
      %p87 = scmp.eq.s32.totalorder %s26, 0
      %p88 = por %p86, %p87
      %s90 = sadd.s32 %s89, 1
      %p93 = scmp.eq.s32.totalorder %s20, 1
      %p94 = scmp.ne.s32.totalorder %s89, %s91
      %p95 = scmp.eq.s32.totalorder %s20, 0
      %p96 = por %p94, %p95
      %p97 = scmp.ne.s32.totalorder %s89, %s91
      %p98 = scmp.eq.s32.totalorder %s25, 1
      %p99 = por %p97, %p98
      %p100 = scmp.ne.s32.totalorder %s91, %s92
      %p101 = scmp.eq.s32.totalorder %s25, 0
      %p102 = por %p100, %p101
      %p103 = scmp.ne.s32.totalorder %s91, %s92
      %p104 = scmp.eq.s32.totalorder %s26, 1
      %p105 = por %p103, %p104
      %p107 = scmp.ne.s32.totalorder %s92, %s106
      %p108 = scmp.eq.s32.totalorder %s26, 0
      %p109 = por %p107, %p108
      %s111 = sadd.s32 %s110, 1
      %p114 = scmp.eq.s32.totalorder %s20, 1
      %p115 = scmp.ne.s32.totalorder %s110, %s112
      %p116 = scmp.eq.s32.totalorder %s20, 0
      %p117 = por %p115, %p116
      %p118 = scmp.ne.s32.totalorder %s110, %s112
      %p119 = scmp.eq.s32.totalorder %s25, 1
      %p120 = por %p118, %p119
      %p121 = scmp.ne.s32.totalorder %s112, %s113
      %p122 = scmp.eq.s32.totalorder %s25, 0
      %p123 = por %p121, %p122
      %p124 = scmp.ne.s32.totalorder %s112, %s113
      %p125 = scmp.eq.s32.totalorder %s26, 1
      %p126 = por %p124, %p125
      %p128 = scmp.ne.s32.totalorder %s113, %s127
      %p129 = scmp.eq.s32.totalorder %s26, 0
      %p130 = por %p128, %p129
      %s132 = sadd.s32 %s131, 1
      %p135 = scmp.eq.s32.totalorder %s20, 1
      %p136 = scmp.ne.s32.totalorder %s131, %s133
      %p137 = scmp.eq.s32.totalorder %s20, 0
      %p138 = por %p136, %p137
      %p139 = scmp.ne.s32.totalorder %s131, %s133
      %p140 = scmp.eq.s32.totalorder %s25, 1
      %p141 = por %p139, %p140
      %p142 = scmp.ne.s32.totalorder %s133, %s134
      %p143 = scmp.eq.s32.totalorder %s25, 0
      %p144 = por %p142, %p143
      %p145 = scmp.ne.s32.totalorder %s133, %s134
      %p146 = scmp.eq.s32.totalorder %s26, 1
      %p147 = por %p145, %p146
      %p149 = scmp.ne.s32.totalorder %s134, %s148
      %p150 = scmp.eq.s32.totalorder %s26, 0
      %p151 = por %p149, %p150
      %s153 = sadd.s32 %s152, 1
      %p156 = scmp.eq.s32.totalorder %s20, 1
      %p157 = scmp.ne.s32.totalorder %s152, %s154
      %p158 = scmp.eq.s32.totalorder %s20, 0
      %p159 = por %p157, %p158
      %p160 = scmp.ne.s32.totalorder %s152, %s154
      %p161 = scmp.eq.s32.totalorder %s25, 1
      %p162 = por %p160, %p161
      %p163 = scmp.ne.s32.totalorder %s154, %s155
      %p164 = scmp.eq.s32.totalorder %s25, 0
      %p165 = por %p163, %p164
      %p166 = scmp.ne.s32.totalorder %s154, %s155
      %p167 = scmp.eq.s32.totalorder %s26, 1
      %p168 = por %p166, %p167
      %p170 = scmp.ne.s32.totalorder %s155, %s169
      %p171 = scmp.eq.s32.totalorder %s26, 0
      %p172 = por %p170, %p171
      %s174 = sadd.s32 %s173, 1
      %p177 = scmp.eq.s32.totalorder %s20, 1
      %p178 = scmp.ne.s32.totalorder %s173, %s175
      %p179 = scmp.eq.s32.totalorder %s20, 0
      %p180 = por %p178, %p179
      %p181 = scmp.ne.s32.totalorder %s173, %s175
      %p182 = scmp.eq.s32.totalorder %s25, 1
      %p183 = por %p181, %p182
      %p184 = scmp.ne.s32.totalorder %s175, %s176
      %p185 = scmp.eq.s32.totalorder %s25, 0
      %p186 = por %p184, %p185
      %p187 = scmp.ne.s32.totalorder %s175, %s176
      %p188 = scmp.eq.s32.totalorder %s26, 1
      %p189 = por %p187, %p188
      %p191 = scmp.ne.s32.totalorder %s176, %s190
      %p192 = scmp.eq.s32.totalorder %s26, 0
      %p193 = por %p191, %p192
      %s194 = ssub.s32 %s27, %s39
      %s195 = ssub.s32 %s28, %s35
      %s196 = sor.u32 %s194, %s195
      %p197 = scmp.eq.s32.totalorder %s196, 0
      %s199 = sadd.s32 %s198, 1
      %s200 = scalar_select %p197, %s198, %s199
      %p203 = pneg %p197
      %p204 = scmp.eq.s32.totalorder %s20, 1
      %p205 = por %p203, %p204
      %p206 = scmp.ne.s32.totalorder %s198, %s201
      %p207 = scmp.eq.s32.totalorder %s20, 0
      %p208 = por %p206, %p207
      %p209 = scmp.ne.s32.totalorder %s198, %s201
      %p210 = scmp.eq.s32.totalorder %s25, 1
      %p211 = por %p209, %p210
      %p212 = scmp.ne.s32.totalorder %s201, %s202
      %p213 = scmp.eq.s32.totalorder %s25, 0
      %p214 = por %p212, %p213
      %p215 = scmp.ne.s32.totalorder %s201, %s202
      %p216 = scmp.eq.s32.totalorder %s26, 1
      %p217 = por %p215, %p216
      %p219 = scmp.ne.s32.totalorder %s202, %s218
      %p220 = scmp.eq.s32.totalorder %s26, 0
      %p221 = por %p219, %p220
      %p222 = scmp.le.s32.totalorder 1, %s20
      %p223 = scmp.lt.s32.totalorder %s20, 3
      %p224 = pnand %p222, %p223
      %p225 = pneg %p224
      // Predicated region
      $region9: #{tpu_custom_call.1} parent=5 // pred_check
        _
      $region10: #{tpu_custom_call.1} parent=5 // pred_check_branch
        %227 = sbr.rel (%p224) target = $region12
      $region11: #{tpu_custom_call.1} parent=5 // pred_region
        %s228 = ssub.s32 %s20, 1
        // Predicated region
        $region13: #{tpu_custom_call.1} parent=11 // pred_check
          %p229 = pneg %p81
        $region14: #{tpu_custom_call.1} parent=11 // pred_check_branch
          %231 = sbr.rel (%p229) target = $region16
        $region15: #{tpu_custom_call.1} parent=11 // pred_region
          _
        $region16: #{tpu_custom_call.1} parent=11 // pred_fallthru
          _
        // Predicated region
        $region17: #{tpu_custom_call.1} parent=11 // pred_check
          %p232 = pneg %p102
        $region18: #{tpu_custom_call.1} parent=11 // pred_check_branch
          %234 = sbr.rel (%p232) target = $region20
        $region19: #{tpu_custom_call.1} parent=11 // pred_region
          _
        $region20: #{tpu_custom_call.1} parent=11 // pred_fallthru
          _
        // Predicated region
        $region21: #{tpu_custom_call.1} parent=11 // pred_check
          %p235 = pneg %p123
        $region22: #{tpu_custom_call.1} parent=11 // pred_check_branch
          %237 = sbr.rel (%p235) target = $region24
        $region23: #{tpu_custom_call.1} parent=11 // pred_region
          _
        $region24: #{tpu_custom_call.1} parent=11 // pred_fallthru
          _
        // Predicated region
        $region25: #{tpu_custom_call.1} parent=11 // pred_check
          %p238 = pneg %p144
        $region26: #{tpu_custom_call.1} parent=11 // pred_check_branch
          %240 = sbr.rel (%p238) target = $region28
        $region27: #{tpu_custom_call.1} parent=11 // pred_region
          _
        $region28: #{tpu_custom_call.1} parent=11 // pred_fallthru
          _
        // Predicated region
        $region29: #{tpu_custom_call.1} parent=11 // pred_check
          %p241 = pneg %p165
        $region30: #{tpu_custom_call.1} parent=11 // pred_check_branch
          %243 = sbr.rel (%p241) target = $region32
        $region31: #{tpu_custom_call.1} parent=11 // pred_region
          _
        $region32: #{tpu_custom_call.1} parent=11 // pred_fallthru
          _
        // Predicated region
        $region33: #{tpu_custom_call.1} parent=11 // pred_check
          %p244 = pneg %p186
        $region34: #{tpu_custom_call.1} parent=11 // pred_check_branch
          %246 = sbr.rel (%p244) target = $region36
        $region35: #{tpu_custom_call.1} parent=11 // pred_region
          _
        $region36: #{tpu_custom_call.1} parent=11 // pred_fallthru
          _
      $region12: #{tpu_custom_call.1} parent=5 // pred_fallthru
        _
      %p247 = scmp.lt.s32.totalorder %s20, 2
      // Predicated region
      $region37: #{tpu_custom_call.1} parent=5 // pred_check
        %p248 = pneg %p247
      $region38: #{tpu_custom_call.1} parent=5 // pred_check_branch
        %250 = sbr.rel (%p248) target = $region40
      $region39: #{tpu_custom_call.1} parent=5 // pred_region
        // Predicated region
        $region41: #{tpu_custom_call.1} parent=39 // pred_check
          %p251 = pneg %p54
        $region42: #{tpu_custom_call.1} parent=39 // pred_check_branch
          %253 = sbr.rel (%p251) target = $region44
        $region43: #{tpu_custom_call.1} parent=39 // pred_region
          %s254 = sand.u32 %s44, 1
          %s255 = scalar_lea.sflag [#allocation4], %s254
          %s256 = sand.u32 %s44, 1
          %s257 = smul.addr %s256, 128
          %s258 = scalar_lea.vmem [#allocation3], %s257
          %s259 = smul.u32 2, %s28
          %s261 = ssub.s32 2048, 2048
          %262 = vsyncadd %s255, %s261
          %s263 = smul.addr %s27, 16
          %s264 = sadd.s32 %s259, %s263
          %s265 = smul.addr %s264, 128
          %s266 = scalar_lea.hbm %s0, %s265
          %s267 = sshll.u32 %s258, 4
          %s268 = int_to_ptr.vmem [resolvable:$true] %s267
          %273 = dma.hbm_to_vmem [thread:$0]  %s266, 2048, %s268, %s255, 256, 256, 16
        $region44: #{tpu_custom_call.1} parent=39 // pred_fallthru
          _
      $region40: #{tpu_custom_call.1} parent=5 // pred_fallthru
        _
      %p274 = scmp.le.s32.totalorder 1, %s20
      %p275 = scmp.lt.s32.totalorder %s20, 3
      %p276 = pnand %p274, %p275
      %p277 = pneg %p276
      // Predicated region
      $region45: #{tpu_custom_call.1} parent=5 // pred_check
        _
      $region46: #{tpu_custom_call.1} parent=5 // pred_check_branch
        %279 = sbr.rel (%p276) target = $region48
      $region47: #{tpu_custom_call.1} parent=5 // pred_region
        %s280 = ssub.s32 %s20, 1
        %s281 = sand.u32 %s47, 1
        %s282 = scalar_lea.sflag [#allocation4], %s281
        %s283 = sand.u32 %s47, 1
        %s284 = smul.addr %s283, 128
        %s285 = scalar_lea.vmem [#allocation3], %s284
        // Predicated region
        $region49: #{tpu_custom_call.1} parent=47 // pred_check
          %p286 = pneg %p60
        $region50: #{tpu_custom_call.1} parent=47 // pred_check_branch
          %288 = sbr.rel (%p286) target = $region52
        $region51: #{tpu_custom_call.1} parent=47 // pred_region
          %289 = dma.done %s282, 2048
        $region52: #{tpu_custom_call.1} parent=47 // pred_fallthru
          _
        %s290 = sand.u32 %s47, 1
        %s291 = scalar_lea.sflag [#allocation4], %s290
        %s292 = sand.u32 %s47, 1
        %s293 = smul.addr %s292, 128
        %s294 = scalar_lea.vmem [#allocation3], %s293
        %p295 = pneg %p60
        %p296 = pneg %p57
        %p297 = pneg %p81
        %p298 = pneg %p78
        %p299 = pneg %p102
        %p300 = pneg %p99
        %p301 = pneg %p123
        %p302 = pneg %p120
        %p303 = pneg %p144
        %p304 = pneg %p141
        %p305 = pneg %p165
        %p306 = pneg %p162
        %p307 = pneg %p186
        %p308 = pneg %p183
        %p309 = pneg %p214
        %p310 = pneg %p211
        %s311 = sand.u32 %s201, 1
        %s312 = scalar_lea.sflag [#allocation5], %s311
        %s313 = sand.u32 %s201, 1
        %s314 = smul.addr %s313, 2
        %s315 = scalar_lea.vmem [#allocation6], %s314
        %s316 = smul.u32 2, %s30
        %s317 = smul.u32 2, %s30
        %v319 = vld [vmem:[%s1] sm:$0xf]
        %v320 = vld [vmem:[%s1 + $0x4] sm:$0xf]
        %v321 = vld [vmem:[%s1 + $0x8] sm:$0xf]
        %v322 = vld [vmem:[%s1 + $0xc] sm:$0xf]
        %v323 = vld [vmem:[%s1 + $0x10] sm:$0xf]
        %v324 = vld [vmem:[%s1 + $0x14] sm:$0xf]
        %v325 = vld [vmem:[%s1 + $0x18] sm:$0xf]
        %v326 = vld [vmem:[%s1 + $0x1c] sm:$0xf]
        %v327 = vld [vmem:[%s3] sm:$0xf]
        %v328 = vld [vmem:[%s3 + $0x4] sm:$0xf]
        %v329 = vld [vmem:[%s3 + $0x8] sm:$0xf]
        %v330 = vld [vmem:[%s3 + $0xc] sm:$0xf]
        %v331 = vld [vmem:[%s2] sm:$0xff]
        %v332 = vld [vmem:[%s2 + $0x8] sm:$0xff]
        %v333 = vld [vmem:[%s2 + $0x10] sm:$0xff]
        %v334 = vld [vmem:[%s2 + $0x18] sm:$0xff]
        %v335 = vld [vmem:[%s2 + $0x20] sm:$0xff]
        %v336 = vld [vmem:[%s2 + $0x28] sm:$0xff]
        %v337 = vld [vmem:[%s2 + $0x30] sm:$0xff]
        %v338 = vld [vmem:[%s2 + $0x38] sm:$0xff]
        %v339 = vld [vmem:[%s4] sm:$0xff]
        %v340 = vld [vmem:[%s4 + $0x8] sm:$0xff]
        %v341 = vld [vmem:[%s4 + $0x10] sm:$0xff]
        %v342 = vld [vmem:[%s4 + $0x18] sm:$0xff]
        %v343 = vld [vmem:[%s5] sm:$0xff]
        %v344 = vld [vmem:[%s5 + $0x8] sm:$0xff]
        %v345 = vld [vmem:[%s5 + $0x10] sm:$0xff]
        %v346 = vld [vmem:[%s5 + $0x18] sm:$0xff]
        %s347 = sld [smem:[#allocation2]]
        %v348 = vld [vmem:[%s285] sm:$0xff]
        %v349 = vld [vmem:[%s285 + $0x8] sm:$0xff]
        %v350 = vld [vmem:[%s285 + $0x10] sm:$0xff]
        %v351 = vld [vmem:[%s285 + $0x18] sm:$0xff]
        %v352 = vld [vmem:[%s285 + $0x20] sm:$0xff]
        %v353 = vld [vmem:[%s285 + $0x28] sm:$0xff]
        %v354 = vld [vmem:[%s285 + $0x30] sm:$0xff]
        %v355 = vld [vmem:[%s285 + $0x38] sm:$0xff]
        %v356 = vld [vmem:[%s285 + $0x40] sm:$0xff]
        %v357 = vld [vmem:[%s285 + $0x48] sm:$0xff]
        %v358 = vld [vmem:[%s285 + $0x50] sm:$0xff]
        %v359 = vld [vmem:[%s285 + $0x58] sm:$0xff]
        %v360 = vld [vmem:[%s285 + $0x60] sm:$0xff]
        %v361 = vld [vmem:[%s285 + $0x68] sm:$0xff]
        %v362 = vld [vmem:[%s285 + $0x70] sm:$0xff]
        %v363 = vld [vmem:[%s285 + $0x78] sm:$0xff]
        %v364 = vpack.c.bf16 %v350, %v348
        %v365 = vpack.c.bf16 %v351, %v349
        %v366 = vpack.c.bf16 %v354, %v352
        %v367 = vpack.c.bf16 %v355, %v353
        %v368 = vpack.c.bf16 %v358, %v356
        %v369 = vpack.c.bf16 %v359, %v357
        %v370 = vpack.c.bf16 %v362, %v360
        %v371 = vpack.c.bf16 %v363, %v361
        %373 = vset.pattern.permute.xlu0 0
        %374 = vperm.xlu0 %373, %v331
        %v375 = vpop.permute.xlu0 %374
        %378 = vset.pattern.permute.xlu0 0
        %379 = vperm.xlu0 %378, %v332
        %v380 = vpop.permute.xlu0 %379
        %383 = vset.pattern.permute.xlu0 0
        %384 = vperm.xlu0 %383, %v333
        %v385 = vpop.permute.xlu0 %384
        %388 = vset.pattern.permute.xlu0 0
        %389 = vperm.xlu0 %388, %v334
        %v390 = vpop.permute.xlu0 %389
        %393 = vset.pattern.permute.xlu0 0
        %394 = vperm.xlu0 %393, %v335
        %v395 = vpop.permute.xlu0 %394
        %398 = vset.pattern.permute.xlu0 0
        %399 = vperm.xlu0 %398, %v336
        %v400 = vpop.permute.xlu0 %399
        %403 = vset.pattern.permute.xlu0 0
        %404 = vperm.xlu0 %403, %v337
        %v405 = vpop.permute.xlu0 %404
        %408 = vset.pattern.permute.xlu0 0
        %409 = vperm.xlu0 %408, %v338
        %v410 = vpop.permute.xlu0 %409
        %v420 = vunpack.c.l.b16 %v319
        %v421 = vunpack.c.l.b16 %v320
        %v422 = vunpack.c.l.b16 %v321
        %v423 = vunpack.c.l.b16 %v322
        %v424 = vunpack.c.l.b16 %v323
        %v425 = vunpack.c.l.b16 %v324
        %v426 = vunpack.c.l.b16 %v325
        %v427 = vunpack.c.l.b16 %v326
        %v428 = vpack.c.b16 %v421, %v420
        %v429 = vpack.c.b16 %v423, %v422
        %v430 = vpack.c.b16 %v425, %v424
        %v431 = vpack.c.b16 %v427, %v426
        %vm432 = vcmask 523264
        %v434 = vsel %vm432, %v428, 0
        %v437 = vsel %vm432, %v429, 0
        %v440 = vsel %vm432, %v430, 0
        %v443 = vsel %vm432, %v431, 0
        %445 = vmatprep.subr.bf16.mxu0 0
        %446 = vmatpush1.bf16.msra.mxu0 0
        %447 = vmatprep.subr.bf16.mxu0 0
        %448 = vmatpush1.bf16.msra.mxu0 0
        %449 = vmatprep.subr.bf16.mxu0 0
        %450 = vmatpush1.bf16.msra.mxu0 0
        %451 = vmatprep.subr.bf16.mxu0 0
        %452 = vmatpush1.bf16.msra.mxu0 0
        %453 = vmatprep.subr.bf16.mxu0 %v371
        %454 = vmatpush1.bf16.msra.mxu0 %v370
        %455 = vmatprep.subr.bf16.mxu0 %v369
        %456 = vmatpush1.bf16.msra.mxu0 %v368
        %457 = vmatprep.subr.bf16.mxu0 %v367
        %458 = vmatpush1.bf16.msra.mxu0 %v366
        %459 = vmatprep.subr.bf16.mxu0 %v365
        %460 = vmatpush1.bf16.msra.mxu0 %v364
        %461 = vmatprep.subr.bf16.mxu0 0
        %462 = vmatpush2.bf16.msra.mxu0 0
        %463 = vmatprep.subr.bf16.mxu0 0
        %464 = vmatpush2.bf16.msra.mxu0 0
        %465 = vmatprep.subr.bf16.mxu0 0
        %466 = vmatpush2.bf16.msra.mxu0 0
        %467 = vmatprep.subr.bf16.mxu0 0
        %468 = vmatpush2.bf16.msra.mxu0 0
        %469 = vmatprep.subr.bf16.mxu0 0
        %470 = vmatpush2.bf16.msra.mxu0 0
        %471 = vmatprep.subr.bf16.mxu0 0
        %472 = vmatpush2.bf16.msra.mxu0 0
        %473 = vmatprep.subr.bf16.mxu0 0
        %474 = vmatpush2.bf16.msra.mxu0 0
        %475 = vmatprep.subr.bf16.mxu0 0
        %476 = vmatpush2.bf16.msra.mxu0 0
        %477 = vmatprep.mubr.bf16.mxu0 0
        %478 = vmatmul.mubr.bf16.gmra.mxu0 %v434
        %v479 = vpop.f32.mrf.mxu0
        %v480 = vadd.f32 %v375, %v479
        %v481 = vpop.f32.mrf.mxu0
        %v482 = vadd.f32 %v375, %v481
        %v483 = vpop.f32.mrf.mxu0
        %v484 = vadd.f32 %v380, %v483
        %v485 = vpop.f32.mrf.mxu0
        %v486 = vadd.f32 %v380, %v485
        %487 = vmatprep.mubr.bf16.mxu0 0
        %488 = vmatmul.mubr.bf16.gmra.mxu0 %v437
        %v489 = vpop.f32.mrf.mxu0
        %v490 = vadd.f32 %v385, %v489
        %v491 = vpop.f32.mrf.mxu0
        %v492 = vadd.f32 %v385, %v491
        %v493 = vpop.f32.mrf.mxu0
        %v494 = vadd.f32 %v390, %v493
        %v495 = vpop.f32.mrf.mxu0
        %v496 = vadd.f32 %v390, %v495
        %497 = vmatprep.mubr.bf16.mxu0 0
        %498 = vmatmul.mubr.bf16.gmra.mxu0 %v440
        %v499 = vpop.f32.mrf.mxu0
        %v500 = vadd.f32 %v395, %v499
        %v501 = vpop.f32.mrf.mxu0
        %v502 = vadd.f32 %v395, %v501
        %v503 = vpop.f32.mrf.mxu0
        %v504 = vadd.f32 %v400, %v503
        %v505 = vpop.f32.mrf.mxu0
        %v506 = vadd.f32 %v400, %v505
        %507 = vmatprep.mubr.bf16.mxu0 0
        %508 = vmatmul.mubr.bf16.gmra.mxu0 %v443
        %v509 = vpop.f32.mrf.mxu0
        %v510 = vadd.f32 %v405, %v509
        %v511 = vpop.f32.mrf.mxu0
        %v512 = vadd.f32 %v405, %v511
        %v513 = vpop.f32.mrf.mxu0
        %v514 = vadd.f32 %v410, %v513
        %v515 = vpop.f32.mrf.mxu0
        %v516 = vadd.f32 %v410, %v515
        %517 = vdwg.mxu0
        %v518 = vmul.f32 %v480, 0.02
        %v519 = vmul.f32 %v482, 0.02
        %v520 = vmul.f32 %v484, 0.02
        %v521 = vmul.f32 %v486, 0.02
        %v522 = vmul.f32 %v490, 0.02
        %v523 = vmul.f32 %v492, 0.02
        %v524 = vmul.f32 %v494, 0.02
        %v525 = vmul.f32 %v496, 0.02
        %v526 = vmul.f32 %v500, 0.02
        %v527 = vmul.f32 %v502, 0.02
        %v528 = vmul.f32 %v504, 0.02
        %v529 = vmul.f32 %v506, 0.02
        %v530 = vmul.f32 %v510, 0.02
        %v531 = vmul.f32 %v512, 0.02
        %v532 = vmul.f32 %v514, 0.02
        %v533 = vmul.f32 %v516, 0.02
        %v534 = vmax.f32 %v480, %v518
        %v535 = vmax.f32 %v482, %v519
        %v536 = vmax.f32 %v484, %v520
        %v537 = vmax.f32 %v486, %v521
        %v538 = vmax.f32 %v490, %v522
        %v539 = vmax.f32 %v492, %v523
        %v540 = vmax.f32 %v494, %v524
        %v541 = vmax.f32 %v496, %v525
        %v542 = vmax.f32 %v500, %v526
        %v543 = vmax.f32 %v502, %v527
        %v544 = vmax.f32 %v504, %v528
        %v545 = vmax.f32 %v506, %v529
        %v546 = vmax.f32 %v510, %v530
        %v547 = vmax.f32 %v512, %v531
        %v548 = vmax.f32 %v514, %v532
        %v549 = vmax.f32 %v516, %v533
        %v550 = vpack.c.bf16 %v536, %v534
        %v551 = vpack.c.bf16 %v537, %v535
        %v552 = vpack.c.bf16 %v540, %v538
        %v553 = vpack.c.bf16 %v541, %v539
        %v554 = vpack.c.bf16 %v544, %v542
        %v555 = vpack.c.bf16 %v545, %v543
        %v556 = vpack.c.bf16 %v548, %v546
        %v557 = vpack.c.bf16 %v549, %v547
        %559 = vset.pattern.permute.xlu0 0
        %560 = vperm.xlu0 %559, %v339
        %v561 = vpop.permute.xlu0 %560
        %564 = vset.pattern.permute.xlu0 0
        %565 = vperm.xlu0 %564, %v340
        %v566 = vpop.permute.xlu0 %565
        %569 = vset.pattern.permute.xlu0 0
        %570 = vperm.xlu0 %569, %v341
        %v571 = vpop.permute.xlu0 %570
        %574 = vset.pattern.permute.xlu0 0
        %575 = vperm.xlu0 %574, %v342
        %v576 = vpop.permute.xlu0 %575
        %v582 = vunpack.c.l.b16 %v327
        %v583 = vunpack.c.l.b16 %v328
        %v584 = vunpack.c.l.b16 %v329
        %v585 = vunpack.c.l.b16 %v330
        %v586 = vpack.c.b16 %v583, %v582
        %v587 = vpack.c.b16 %v585, %v584
        %v589 = vsel %vm432, %v586, 0
        %v592 = vsel %vm432, %v587, 0
        %594 = vmatprep.subr.bf16.mxu0 0
        %595 = vmatpush1.bf16.msra.mxu0 0
        %596 = vmatprep.subr.bf16.mxu0 0
        %597 = vmatpush1.bf16.msra.mxu0 0
        %598 = vmatprep.subr.bf16.mxu0 0
        %599 = vmatpush1.bf16.msra.mxu0 0
        %600 = vmatprep.subr.bf16.mxu0 0
        %601 = vmatpush1.bf16.msra.mxu0 0
        %602 = vmatprep.subr.bf16.mxu0 %v557
        %603 = vmatpush1.bf16.msra.mxu0 %v556
        %604 = vmatprep.subr.bf16.mxu0 %v555
        %605 = vmatpush1.bf16.msra.mxu0 %v554
        %606 = vmatprep.subr.bf16.mxu0 %v553
        %607 = vmatpush1.bf16.msra.mxu0 %v552
        %608 = vmatprep.subr.bf16.mxu0 %v551
        %609 = vmatpush1.bf16.msra.mxu0 %v550
        %610 = vmatprep.subr.bf16.mxu0 0
        %611 = vmatpush2.bf16.msra.mxu0 0
        %612 = vmatprep.subr.bf16.mxu0 0
        %613 = vmatpush2.bf16.msra.mxu0 0
        %614 = vmatprep.subr.bf16.mxu0 0
        %615 = vmatpush2.bf16.msra.mxu0 0
        %616 = vmatprep.subr.bf16.mxu0 0
        %617 = vmatpush2.bf16.msra.mxu0 0
        %618 = vmatprep.subr.bf16.mxu0 0
        %619 = vmatpush2.bf16.msra.mxu0 0
        %620 = vmatprep.subr.bf16.mxu0 0
        %621 = vmatpush2.bf16.msra.mxu0 0
        %622 = vmatprep.subr.bf16.mxu0 0
        %623 = vmatpush2.bf16.msra.mxu0 0
        %624 = vmatprep.subr.bf16.mxu0 0
        %625 = vmatpush2.bf16.msra.mxu0 0
        %626 = vmatprep.mubr.bf16.mxu0 0
        %627 = vmatmul.mubr.bf16.gmra.mxu0 %v589
        %v628 = vpop.f32.mrf.mxu0
        %v629 = vadd.f32 %v561, %v628
        %v630 = vpop.f32.mrf.mxu0
        %v631 = vadd.f32 %v561, %v630
        %v632 = vpop.f32.mrf.mxu0
        %v633 = vadd.f32 %v566, %v632
        %v634 = vpop.f32.mrf.mxu0
        %v635 = vadd.f32 %v566, %v634
        %636 = vmatprep.mubr.bf16.mxu0 0
        %637 = vmatmul.mubr.bf16.gmra.mxu0 %v592
        %v638 = vpop.f32.mrf.mxu0
        %v639 = vadd.f32 %v571, %v638
        %v640 = vpop.f32.mrf.mxu0
        %v641 = vadd.f32 %v571, %v640
        %v642 = vpop.f32.mrf.mxu0
        %v643 = vadd.f32 %v576, %v642
        %v644 = vpop.f32.mrf.mxu0
        %v645 = vadd.f32 %v576, %v644
        %646 = vdwg.mxu0
        %v647 = vmul.f32 %v629, 0.02
        %v648 = vmul.f32 %v631, 0.02
        %v649 = vmul.f32 %v633, 0.02
        %v650 = vmul.f32 %v635, 0.02
        %v651 = vmul.f32 %v639, 0.02
        %v652 = vmul.f32 %v641, 0.02
        %v653 = vmul.f32 %v643, 0.02
        %v654 = vmul.f32 %v645, 0.02
        %v655 = vmax.f32 %v629, %v647
        %v656 = vmax.f32 %v631, %v648
        %v657 = vmax.f32 %v633, %v649
        %v658 = vmax.f32 %v635, %v650
        %v659 = vmax.f32 %v639, %v651
        %v660 = vmax.f32 %v641, %v652
        %v661 = vmax.f32 %v643, %v653
        %v662 = vmax.f32 %v645, %v654
        %664 = vset.pattern.permute.xlu0 0
        %665 = vperm.xlu0 %664, %v343
        %v666 = vpop.permute.xlu0 %665
        %669 = vset.pattern.permute.xlu0 0
        %670 = vperm.xlu0 %669, %v344
        %v671 = vpop.permute.xlu0 %670
        %674 = vset.pattern.permute.xlu0 0
        %675 = vperm.xlu0 %674, %v345
        %v676 = vpop.permute.xlu0 %675
        %679 = vset.pattern.permute.xlu0 0
        %680 = vperm.xlu0 %679, %v346
        %v681 = vpop.permute.xlu0 %680
        %v683 = vmul.f32 %v655, %v666
        %v684 = vmul.f32 %v656, %v666
        %v685 = vmul.f32 %v657, %v671
        %v686 = vmul.f32 %v658, %v671
        %v687 = vmul.f32 %v659, %v676
        %v688 = vmul.f32 %v660, %v676
        %v689 = vmul.f32 %v661, %v681
        %v690 = vmul.f32 %v662, %v681
        %v691 = vadd.f32 %v683, %v685
        %v692 = vadd.f32 %v691, %v687
        %v693 = vadd.f32 %v692, %v689
        %v694 = vrot.slane %v693, 4
        %v695 = vadd.f32 %v693, %v694
        %v696 = vrot.slane %v695, 2
        %v697 = vadd.f32 %v695, %v696
        %v698 = vrot.slane %v697, 1
        %v699 = vadd.f32 %v697, %v698
        %v700 = vadd.f32 %v684, %v686
        %v701 = vadd.f32 %v700, %v688
        %v702 = vadd.f32 %v701, %v690
        %v703 = vrot.slane %v702, 4
        %v704 = vadd.f32 %v702, %v703
        %v705 = vrot.slane %v704, 2
        %v706 = vadd.f32 %v704, %v705
        %v707 = vrot.slane %v706, 1
        %v708 = vadd.f32 %v706, %v707
        %v709 = vstv %s347
        %v710 = vadd.f32 %v699, %v709
        %v711 = vadd.f32 %v708, %v709
        %v714 = vcombine.low %v710, %v711
        %v716 = vunpack.c.l.s4 1966171168
        %v717 = vunpack.c.0.s8 %v716
        %v718 = vlaneseq
        %v719 = vshrl.u32 %v718, 7
        %v720 = vsub.s32 %v717, %v719
        %v721 = vrot.slane %v714, %v720
        %v723 = vunpack.c.l.s4 1966171168
        %v724 = vunpack.c.0.s8 %v723
        %v725 = vlaneseq
        %v726 = vshrl.u32 %v725, 7
        %v727 = vsub.s32 %v724, %v726
        %v728 = vrot.slane %v721, %v727
        %v730 = vlaneseq
        %vm731 = vcmp.ge.s32.totalorder %v730, 0
        %vm732 = vcmp.lt.s32.totalorder %v730, 256
        %vm733 = vmand %vm731, %vm732
        %734 = vst.msk [vmem:[%s315] sm:$0x3] %vm733, %v728
        %s735 = sand.u32 %s201, 1
        %s736 = scalar_lea.sflag [#allocation5], %s735
        %s737 = sand.u32 %s201, 1
        %s738 = smul.addr %s737, 2
        %s739 = scalar_lea.vmem [#allocation6], %s738
        // Predicated region
        $region53: #{tpu_custom_call.1} parent=47 // pred_check
          %p740 = pneg %p211
        $region54: #{tpu_custom_call.1} parent=47 // pred_check_branch
          %742 = sbr.rel (%p740) target = $region56
        $region55: #{tpu_custom_call.1} parent=47 // pred_region
          %s743 = smul.u32 2, %s30
          %s745 = ssub.s32 32, 32
          %746 = vsyncadd %s736, %s745
          %s747 = smul.addr %s29, 2
          %s748 = sadd.s32 %s743, %s747
          %s749 = smul.addr %s748, 16
          %s750 = scalar_lea.hbm %s7, %s749
          %s752 = sshll.u32 %s739, 4
          %s753 = int_to_ptr.vmem [resolvable:$true] %s752
          %755 = dma.vmem_to_hbm [thread:$0]  %s753, 32, %s750, %s736
        $region56: #{tpu_custom_call.1} parent=47 // pred_fallthru
          _
      $region48: #{tpu_custom_call.1} parent=5 // pred_fallthru
        _
      %p756 = scmp.le.s32.totalorder 2, %s20
      // Predicated region
      $region57: #{tpu_custom_call.1} parent=5 // pred_check
        %p757 = pneg %p756
      $region58: #{tpu_custom_call.1} parent=5 // pred_check_branch
        %759 = sbr.rel (%p757) target = $region60
      $region59: #{tpu_custom_call.1} parent=5 // pred_region
        %s760 = ssub.s32 %s20, 2
        // Predicated region
        $region61: #{tpu_custom_call.1} parent=59 // pred_check
          %p761 = pneg %p217
        $region62: #{tpu_custom_call.1} parent=59 // pred_check_branch
          %763 = sbr.rel (%p761) target = $region64
        $region63: #{tpu_custom_call.1} parent=59 // pred_region
          %s764 = sand.u32 %s202, 1
          %s765 = scalar_lea.sflag [#allocation5], %s764
          %s766 = sand.u32 %s202, 1
          %s767 = smul.addr %s766, 2
          %s768 = scalar_lea.vmem [#allocation6], %s767
          %769 = dma.done %s765, 32
        $region64: #{tpu_custom_call.1} parent=59 // pred_fallthru
          _
      $region60: #{tpu_custom_call.1} parent=5 // pred_fallthru
        _
    $region6: #{tpu_custom_call.1} parent=1 // loop_footer
      %s24 = sadd.s32 1, %s20
    $region7: #{tpu_custom_call.1} parent=1 // loop_footer_branch
      %19 = sbr.rel target = $region3
    $region8: #{tpu_custom_call.1} parent=1 // loop_exit
      _
    %770 = vsyncpa [#allocation4], 1
    %s771 = scalar_lea.sflag [#allocation4], 1
    %772 = vsyncpa %s771, 1
    %773 = vsyncpa [#allocation5], 1
    %s774 = scalar_lea.sflag [#allocation5], 1
    %775 = vsyncpa %s774, 1

</llo_original>
